<compile_context>
chip_gen: v7x
topology: tpu7x:2x2x1
jax: 0.10.0
libtpu: 0.0.40
codegen_flags: <defaults>
</compile_context>

<pallas_src>
import jax
import jax.numpy as jnp
import numpy as np
from jax.experimental import pallas as pl
from jax.experimental.pallas import tpu as pltpu


TAPS = tuple((dy, dx) for dy in (-1, 0, 1) for dx in (-1, 0, 1))  # tap-major (kh, kw)


def _round_up(x, m):
    return ((x + m - 1) // m) * m


def make_basic_block_kernel(W, L, output_relu):
    """One grid step: B_TILE images packed side-by-side along the lane axis (L lanes)."""

    def kernel(x_ref, m_ref, w1_ref, b1_ref, w2_ref, b2_ref, o_ref):
        # x_ref : (CP, L)      f32   channels-first, B_TILE images flat along lanes
        # m_ref : (9, L)       f32   per-tap border-validity masks (VMEM-resident)
        # w*_ref: (CP, 9*CP)   bf16  3x3 conv weights, BN scale folded, tap-major
        # b*_ref: (CP, 1)      f32   folded BN bias
        # o_ref : (CP, L)      f32
        x = x_ref[...]
        masks = m_ref[...]

        def conv_patches(z):
            # im2col via lane rotations + resident masks: (CP, L) -> (9*CP, L) bf16.
            # Wrapped reads (across image or tile boundaries) land only on masked
            # lanes, so the result matches zero-padded convolution exactly.
            rows = []
            for k, (dy, dx) in enumerate(TAPS):
                s = dy * W + dx
                shifted = z if s == 0 else pltpu.roll(z, shift=(-s) % L, axis=1)
                rows.append(shifted * masks[k])
            # CP is a multiple of 8 -> sublane-aligned concat (no relayout copies).
            return jnp.concatenate(rows, axis=0).astype(jnp.bfloat16)

        # conv1 (BN1 scale folded into weights) -> +bias -> ReLU
        t1 = jnp.dot(w1_ref[...], conv_patches(x),
                     preferred_element_type=jnp.float32)            # (CP, L) f32
        y1 = jnp.maximum(t1 + b1_ref[...], 0.0)

        # conv2 (BN2 scale folded) -> +bias -> residual (-> optional ReLU)
        t2 = jnp.dot(w2_ref[...], conv_patches(y1),
                     preferred_element_type=jnp.float32)            # (CP, L) f32
        out = t2 + b2_ref[...] + x
        if output_relu:
            out = jnp.maximum(out, 0.0)
        o_ref[...] = out

    return kernel


def _choose_batch_tile(N, CP, HW, budget_bytes=24 << 20):
    """Largest power-of-two B_TILE (<= N) whose per-step VMEM estimate fits the budget."""
    def est(bt):
        L = bt * HW
        io = 2 * 2 * CP * L * 4          # x & out blocks, double-buffered, f32
        masks = 9 * L * 4                # resident mask slab
        patches = 2 * 9 * CP * L * 2     # bf16 im2col slab (headroom for 2 live)
        interm = 4 * CP * L * 4          # f32 temporaries (t1, y1, t2, out)
        return io + masks + patches + interm
    bt = 1
    while bt < N and est(bt * 2) <= budget_bytes:
        bt *= 2
    return bt


def _fold_conv_bn(w_oihw, scale, bias, CP):
    """OIHW weights + BN scale/bias -> ((CP, 9*CP) bf16 folded weight, (CP, 1) f32 bias)."""
    C = w_oihw.shape[0]
    # (Co, Ci, 3, 3) -> (Co, kh, kw, Ci), fold BN scale in f32, pad Co/Ci to CP.
    w = jnp.transpose(w_oihw, (0, 2, 3, 1)) * scale.reshape(C, 1, 1, 1)
    w = jnp.pad(w, ((0, CP - C), (0, 0), (0, 0), (0, CP - C)))
    wk = w.reshape(CP, 9 * CP).astype(jnp.bfloat16)
    bk = jnp.pad(bias, (0, CP - C)).reshape(CP, 1).astype(jnp.float32)
    return wk, bk


def basic_block_forward(x_nchw, raw_params, output_relu=False, core_parallel=False):
    """raw_params = (w1_oihw, s1, b1, w2_oihw, s2, b2) with BN folded to scale/bias."""
    N, C, H, W = x_nchw.shape
    HW = H * W
    CP = _round_up(C, 8)
    w1, s1, b1, w2, s2, b2 = raw_params
    wk1, bk1 = _fold_conv_bn(w1, s1, b1, CP)
    wk2, bk2 = _fold_conv_bn(w2, s2, b2, CP)

    B_TILE = _choose_batch_tile(N, CP, HW)
    T = pl.cdiv(N, B_TILE)
    N_pad = T * B_TILE
    L = B_TILE * HW

    # Channels-first, all images packed along the lane axis: (CP, N_pad*HW).
    x_cm = jnp.transpose(x_nchw.reshape(N, C, HW), (1, 0, 2)).reshape(C, N * HW)
    x_cm = jnp.pad(x_cm, ((0, CP - C), (0, (N_pad - N) * HW)))

    # Resident per-tap border masks, periodic per image: (9, L), f32 (v5e-safe).
    q = np.arange(HW)
    py, px = q // W, q % W
    m = np.stack([((py + dy >= 0) & (py + dy < H) & (px + dx >= 0) & (px + dx < W))
                  for dy, dx in TAPS]).astype(np.float32)            # (9, HW)
    masks = jnp.asarray(np.tile(m, (1, B_TILE)))                     # (9, L)

    # Tile axis is "parallel" everywhere; on v7x with >= 2 tiles, CORE_PARALLEL
    # actually shards the grid across the 2 TensorCores.
    sem = (pltpu.CORE_PARALLEL,) if core_parallel else ("parallel",)

    out_cm = pl.pallas_call(
        make_basic_block_kernel(W, L, output_relu),
        out_shape=jax.ShapeDtypeStruct((CP, N_pad * HW), jnp.float32),
        grid_spec=pltpu.PrefetchScalarGridSpec(
            num_scalar_prefetch=0,
            grid=(T,),
            in_specs=[
                pl.BlockSpec((CP, L), lambda t: (0, t)),          # x tile
                pl.BlockSpec((9, L), lambda t: (0, 0)),           # masks (resident)
                pl.BlockSpec((CP, 9 * CP), lambda t: (0, 0)),     # w1 (folded, bf16)
                pl.BlockSpec((CP, 1), lambda t: (0, 0)),          # b1
                pl.BlockSpec((CP, 9 * CP), lambda t: (0, 0)),     # w2 (folded, bf16)
                pl.BlockSpec((CP, 1), lambda t: (0, 0)),          # b2
            ],
            out_specs=pl.BlockSpec((CP, L), lambda t: (0, t)),
        ),
        compiler_params=pltpu.CompilerParams(
            dimension_semantics=sem,
            vmem_limit_bytes=32 * 1024 * 1024),   # explicit budget (v7x-safe)
    )(x_cm, masks, wk1, bk1, wk2, bk2)

    out = out_cm[:C, :N * HW].reshape(C, N, HW)
    return jnp.transpose(out, (1, 0, 2)).reshape(N, C, H, W)


def init_params(key, C, eps=1e-5):
    # TODO(synk): training-mode BatchNorm (running-stat updates) is not modeled;
    #             BN is folded to inference-mode per-channel scale/bias.
    ks = jax.random.split(key, 10)

    def conv_bn(kw, kg, kb, km, kv):
        w = jax.random.normal(kw, (C, C, 3, 3), jnp.float32) * 0.1      # OIHW
        gamma = 1.0 + 0.1 * jax.random.normal(kg, (C,), jnp.float32)
        beta = 0.1 * jax.random.normal(kb, (C,), jnp.float32)
        mean = 0.05 * jax.random.normal(km, (C,), jnp.float32)
        var = 1.0 + 0.1 * jnp.abs(jax.random.normal(kv, (C,), jnp.float32))
        s = gamma / jnp.sqrt(var + eps)
        b = beta - mean * s
        return w, s, b

    w1, s1, b1 = conv_bn(*ks[0:5])
    w2, s2, b2 = conv_bn(*ks[5:10])
    return (w1, s1, b1, w2, s2, b2)


def basic_block_ref_nchw(x, w1_oihw, s1, b1, w2_oihw, s2, b2, output_relu=False):
    """Pure-JAX f32 NCHW reference of the PyTorch forward (inference BN folded)."""
    def conv(z, w):
        return jax.lax.conv_general_dilated(
            z, w, (1, 1), ((1, 1), (1, 1)),
            dimension_numbers=('NCHW', 'OIHW', 'NCHW'))
    y = conv(x, w1_oihw) * s1.reshape(1, -1, 1, 1) + b1.reshape(1, -1, 1, 1)
    y = jnp.maximum(y, 0.0)
    y = conv(y, w2_oihw) * s2.reshape(1, -1, 1, 1) + b2.reshape(1, -1, 1, 1)
    y = y + x
    return jnp.maximum(y, 0.0) if output_relu else y


if __name__ == "__main__":
    N, C, H, W = 2, 4, 16, 16

    key = jax.random.PRNGKey(0)
    kx, kp = jax.random.split(key)
    x_nchw = jax.random.normal(kx, (N, C, H, W), jnp.float32)

    raw = init_params(kp, C)

    out = basic_block_forward(x_nchw, raw, output_relu=False)
    out = jax.block_until_ready(out)

    ref = basic_block_ref_nchw(x_nchw, *raw, output_relu=False)
    # Tolerance accounts for bf16 MXU operands (accumulation stays f32).
    np.testing.assert_allclose(np.asarray(out), np.asarray(ref), rtol=5e-2, atol=5e-2)
    print("KERNEL_OK")
</pallas_src>

<mosaic_0001>
module attributes {stable_mosaic.version = 11 : i64} {
  func.func @kernel(%arg0: i32, %arg1: memref<8x512xf32, #tpu.memory_space<vmem>>, %arg2: memref<9x512xf32, #tpu.memory_space<vmem>>, %arg3: memref<8x72xbf16, #tpu.memory_space<vmem>>, %arg4: memref<8x1xf32, #tpu.memory_space<vmem>>, %arg5: memref<8x72xbf16, #tpu.memory_space<vmem>>, %arg6: memref<8x1xf32, #tpu.memory_space<vmem>>, %arg7: memref<8x512xf32, #tpu.memory_space<vmem>>) attributes {dimension_semantics = [#tpu.dimension_semantics<parallel>], iteration_bounds = array<i64: 1>, scalar_prefetch = 0 : i64, scratch_operands = 0 : i64, tpu.core_type = #tpu.core_type<tc>, window_params = [{transform_indices = @transform_0, window_bounds = array<i64: 8, 512>}, {pipeline_mode = #tpu.pipeline_mode<synchronous>, transform_indices = @transform_1, window_bounds = array<i64: 9, 512>}, {pipeline_mode = #tpu.pipeline_mode<synchronous>, transform_indices = @transform_2, window_bounds = array<i64: 8, 72>}, {pipeline_mode = #tpu.pipeline_mode<synchronous>, transform_indices = @transform_3, window_bounds = array<i64: 8, 1>}, {pipeline_mode = #tpu.pipeline_mode<synchronous>, transform_indices = @transform_4, window_bounds = array<i64: 8, 72>}, {pipeline_mode = #tpu.pipeline_mode<synchronous>, transform_indices = @transform_5, window_bounds = array<i64: 8, 1>}, {transform_indices = @transform_6, window_bounds = array<i64: 8, 512>}]} {
    %c0 = arith.constant 0 : index
    %c0_0 = arith.constant 0 : index
    %0 = vector.load %arg1[%c0, %c0_0] : memref<8x512xf32, #tpu.memory_space<vmem>>, vector<8x512xf32>
    %c0_1 = arith.constant 0 : index
    %c0_2 = arith.constant 0 : index
    %1 = vector.load %arg2[%c0_1, %c0_2] : memref<9x512xf32, #tpu.memory_space<vmem>>, vector<9x512xf32>
    %c0_3 = arith.constant 0 : index
    %c0_4 = arith.constant 0 : index
    %2 = vector.load %arg3[%c0_3, %c0_4] : memref<8x72xbf16, #tpu.memory_space<vmem>>, vector<8x72xbf16>
    %c17_i32 = arith.constant 17 : i32
    %3 = tpu.dynamic_rotate %0 by %c17_i32 dim 1 : vector<8x512xf32>, i32 -> vector<8x512xf32>
    %4 = vector.extract_strided_slice %1 {offsets = [0, 0], sizes = [1, 512], strides = [1, 1]} : vector<9x512xf32> to vector<1x512xf32>
    %5 = vector.shape_cast %4 : vector<1x512xf32> to vector<512xf32>
    %6 = vector.shape_cast %5 : vector<512xf32> to vector<1x512xf32>
    %7 = vector.broadcast %6 : vector<1x512xf32> to vector<8x512xf32>
    %8 = arith.mulf %3, %7 : vector<8x512xf32>
    %c16_i32 = arith.constant 16 : i32
    %9 = tpu.dynamic_rotate %0 by %c16_i32 dim 1 : vector<8x512xf32>, i32 -> vector<8x512xf32>
    %10 = vector.extract_strided_slice %1 {offsets = [1, 0], sizes = [1, 512], strides = [1, 1]} : vector<9x512xf32> to vector<1x512xf32>
    %11 = vector.shape_cast %10 : vector<1x512xf32> to vector<512xf32>
    %12 = vector.shape_cast %11 : vector<512xf32> to vector<1x512xf32>
    %13 = vector.broadcast %12 : vector<1x512xf32> to vector<8x512xf32>
    %14 = arith.mulf %9, %13 : vector<8x512xf32>
    %c15_i32 = arith.constant 15 : i32
    %15 = tpu.dynamic_rotate %0 by %c15_i32 dim 1 : vector<8x512xf32>, i32 -> vector<8x512xf32>
    %16 = vector.extract_strided_slice %1 {offsets = [2, 0], sizes = [1, 512], strides = [1, 1]} : vector<9x512xf32> to vector<1x512xf32>
    %17 = vector.shape_cast %16 : vector<1x512xf32> to vector<512xf32>
    %18 = vector.shape_cast %17 : vector<512xf32> to vector<1x512xf32>
    %19 = vector.broadcast %18 : vector<1x512xf32> to vector<8x512xf32>
    %20 = arith.mulf %15, %19 : vector<8x512xf32>
    %c1_i32 = arith.constant 1 : i32
    %21 = tpu.dynamic_rotate %0 by %c1_i32 dim 1 : vector<8x512xf32>, i32 -> vector<8x512xf32>
    %22 = vector.extract_strided_slice %1 {offsets = [3, 0], sizes = [1, 512], strides = [1, 1]} : vector<9x512xf32> to vector<1x512xf32>
    %23 = vector.shape_cast %22 : vector<1x512xf32> to vector<512xf32>
    %24 = vector.shape_cast %23 : vector<512xf32> to vector<1x512xf32>
    %25 = vector.broadcast %24 : vector<1x512xf32> to vector<8x512xf32>
    %26 = arith.mulf %21, %25 : vector<8x512xf32>
    %27 = vector.extract_strided_slice %1 {offsets = [4, 0], sizes = [1, 512], strides = [1, 1]} : vector<9x512xf32> to vector<1x512xf32>
    %28 = vector.shape_cast %27 : vector<1x512xf32> to vector<512xf32>
    %29 = vector.shape_cast %28 : vector<512xf32> to vector<1x512xf32>
    %30 = vector.broadcast %29 : vector<1x512xf32> to vector<8x512xf32>
    %31 = arith.mulf %0, %30 : vector<8x512xf32>
    %c511_i32 = arith.constant 511 : i32
    %32 = tpu.dynamic_rotate %0 by %c511_i32 dim 1 : vector<8x512xf32>, i32 -> vector<8x512xf32>
    %33 = vector.extract_strided_slice %1 {offsets = [5, 0], sizes = [1, 512], strides = [1, 1]} : vector<9x512xf32> to vector<1x512xf32>
    %34 = vector.shape_cast %33 : vector<1x512xf32> to vector<512xf32>
    %35 = vector.shape_cast %34 : vector<512xf32> to vector<1x512xf32>
    %36 = vector.broadcast %35 : vector<1x512xf32> to vector<8x512xf32>
    %37 = arith.mulf %32, %36 : vector<8x512xf32>
    %c497_i32 = arith.constant 497 : i32
    %38 = tpu.dynamic_rotate %0 by %c497_i32 dim 1 : vector<8x512xf32>, i32 -> vector<8x512xf32>
    %39 = vector.extract_strided_slice %1 {offsets = [6, 0], sizes = [1, 512], strides = [1, 1]} : vector<9x512xf32> to vector<1x512xf32>
    %40 = vector.shape_cast %39 : vector<1x512xf32> to vector<512xf32>
    %41 = vector.shape_cast %40 : vector<512xf32> to vector<1x512xf32>
    %42 = vector.broadcast %41 : vector<1x512xf32> to vector<8x512xf32>
    %43 = arith.mulf %38, %42 : vector<8x512xf32>
    %c496_i32 = arith.constant 496 : i32
    %44 = tpu.dynamic_rotate %0 by %c496_i32 dim 1 : vector<8x512xf32>, i32 -> vector<8x512xf32>
    %45 = vector.extract_strided_slice %1 {offsets = [7, 0], sizes = [1, 512], strides = [1, 1]} : vector<9x512xf32> to vector<1x512xf32>
    %46 = vector.shape_cast %45 : vector<1x512xf32> to vector<512xf32>
    %47 = vector.shape_cast %46 : vector<512xf32> to vector<1x512xf32>
    %48 = vector.broadcast %47 : vector<1x512xf32> to vector<8x512xf32>
    %49 = arith.mulf %44, %48 : vector<8x512xf32>
    %c495_i32 = arith.constant 495 : i32
    %50 = tpu.dynamic_rotate %0 by %c495_i32 dim 1 : vector<8x512xf32>, i32 -> vector<8x512xf32>
    %51 = vector.extract_strided_slice %1 {offsets = [8, 0], sizes = [1, 512], strides = [1, 1]} : vector<9x512xf32> to vector<1x512xf32>
    %52 = vector.shape_cast %51 : vector<1x512xf32> to vector<512xf32>
    %53 = vector.shape_cast %52 : vector<512xf32> to vector<1x512xf32>
    %54 = vector.broadcast %53 : vector<1x512xf32> to vector<8x512xf32>
    %55 = arith.mulf %50, %54 : vector<8x512xf32>
    %56 = tpu.concatenate %8, %14, %20, %26, %31, %37, %43, %49, %55 in 0 : vector<8x512xf32>, vector<8x512xf32>, vector<8x512xf32>, vector<8x512xf32>, vector<8x512xf32>, vector<8x512xf32>, vector<8x512xf32>, vector<8x512xf32>, vector<8x512xf32> -> vector<72x512xf32>
    %57 = arith.truncf %56 : vector<72x512xf32> to vector<72x512xbf16>
    %cst = arith.constant dense<0.000000e+00> : vector<8x512xf32>
    %58 = tpu.matmul %2, %57, %cst {dimension_numbers = #tpu.dot_dimension_numbers<[1], [0], [0], [1], [0, 0, 1, 1], [], []>} : vector<8x72xbf16>, vector<72x512xbf16>, vector<8x512xf32> -> vector<8x512xf32>
    %c0_5 = arith.constant 0 : index
    %c0_6 = arith.constant 0 : index
    %59 = vector.load %arg4[%c0_5, %c0_6] : memref<8x1xf32, #tpu.memory_space<vmem>>, vector<8x1xf32>
    %60 = vector.broadcast %59 : vector<8x1xf32> to vector<8x512xf32>
    %61 = arith.addf %58, %60 : vector<8x512xf32>
    %cst_7 = arith.constant 0.000000e+00 : f32
    %62 = vector.broadcast %cst_7 : f32 to vector<8x512xf32>
    %63 = arith.maximumf %61, %62 : vector<8x512xf32>
    %c0_8 = arith.constant 0 : index
    %c0_9 = arith.constant 0 : index
    %64 = vector.load %arg5[%c0_8, %c0_9] : memref<8x72xbf16, #tpu.memory_space<vmem>>, vector<8x72xbf16>
    %c17_i32_10 = arith.constant 17 : i32
    %65 = tpu.dynamic_rotate %63 by %c17_i32_10 dim 1 : vector<8x512xf32>, i32 -> vector<8x512xf32>
    %66 = vector.extract_strided_slice %1 {offsets = [0, 0], sizes = [1, 512], strides = [1, 1]} : vector<9x512xf32> to vector<1x512xf32>
    %67 = vector.shape_cast %66 : vector<1x512xf32> to vector<512xf32>
    %68 = vector.shape_cast %67 : vector<512xf32> to vector<1x512xf32>
    %69 = vector.broadcast %68 : vector<1x512xf32> to vector<8x512xf32>
    %70 = arith.mulf %65, %69 : vector<8x512xf32>
    %c16_i32_11 = arith.constant 16 : i32
    %71 = tpu.dynamic_rotate %63 by %c16_i32_11 dim 1 : vector<8x512xf32>, i32 -> vector<8x512xf32>
    %72 = vector.extract_strided_slice %1 {offsets = [1, 0], sizes = [1, 512], strides = [1, 1]} : vector<9x512xf32> to vector<1x512xf32>
    %73 = vector.shape_cast %72 : vector<1x512xf32> to vector<512xf32>
    %74 = vector.shape_cast %73 : vector<512xf32> to vector<1x512xf32>
    %75 = vector.broadcast %74 : vector<1x512xf32> to vector<8x512xf32>
    %76 = arith.mulf %71, %75 : vector<8x512xf32>
    %c15_i32_12 = arith.constant 15 : i32
    %77 = tpu.dynamic_rotate %63 by %c15_i32_12 dim 1 : vector<8x512xf32>, i32 -> vector<8x512xf32>
    %78 = vector.extract_strided_slice %1 {offsets = [2, 0], sizes = [1, 512], strides = [1, 1]} : vector<9x512xf32> to vector<1x512xf32>
    %79 = vector.shape_cast %78 : vector<1x512xf32> to vector<512xf32>
    %80 = vector.shape_cast %79 : vector<512xf32> to vector<1x512xf32>
    %81 = vector.broadcast %80 : vector<1x512xf32> to vector<8x512xf32>
    %82 = arith.mulf %77, %81 : vector<8x512xf32>
    %c1_i32_13 = arith.constant 1 : i32
    %83 = tpu.dynamic_rotate %63 by %c1_i32_13 dim 1 : vector<8x512xf32>, i32 -> vector<8x512xf32>
    %84 = vector.extract_strided_slice %1 {offsets = [3, 0], sizes = [1, 512], strides = [1, 1]} : vector<9x512xf32> to vector<1x512xf32>
    %85 = vector.shape_cast %84 : vector<1x512xf32> to vector<512xf32>
    %86 = vector.shape_cast %85 : vector<512xf32> to vector<1x512xf32>
    %87 = vector.broadcast %86 : vector<1x512xf32> to vector<8x512xf32>
    %88 = arith.mulf %83, %87 : vector<8x512xf32>
    %89 = vector.extract_strided_slice %1 {offsets = [4, 0], sizes = [1, 512], strides = [1, 1]} : vector<9x512xf32> to vector<1x512xf32>
    %90 = vector.shape_cast %89 : vector<1x512xf32> to vector<512xf32>
    %91 = vector.shape_cast %90 : vector<512xf32> to vector<1x512xf32>
    %92 = vector.broadcast %91 : vector<1x512xf32> to vector<8x512xf32>
    %93 = arith.mulf %63, %92 : vector<8x512xf32>
    %c511_i32_14 = arith.constant 511 : i32
    %94 = tpu.dynamic_rotate %63 by %c511_i32_14 dim 1 : vector<8x512xf32>, i32 -> vector<8x512xf32>
    %95 = vector.extract_strided_slice %1 {offsets = [5, 0], sizes = [1, 512], strides = [1, 1]} : vector<9x512xf32> to vector<1x512xf32>
    %96 = vector.shape_cast %95 : vector<1x512xf32> to vector<512xf32>
    %97 = vector.shape_cast %96 : vector<512xf32> to vector<1x512xf32>
    %98 = vector.broadcast %97 : vector<1x512xf32> to vector<8x512xf32>
    %99 = arith.mulf %94, %98 : vector<8x512xf32>
    %c497_i32_15 = arith.constant 497 : i32
    %100 = tpu.dynamic_rotate %63 by %c497_i32_15 dim 1 : vector<8x512xf32>, i32 -> vector<8x512xf32>
    %101 = vector.extract_strided_slice %1 {offsets = [6, 0], sizes = [1, 512], strides = [1, 1]} : vector<9x512xf32> to vector<1x512xf32>
    %102 = vector.shape_cast %101 : vector<1x512xf32> to vector<512xf32>
    %103 = vector.shape_cast %102 : vector<512xf32> to vector<1x512xf32>
    %104 = vector.broadcast %103 : vector<1x512xf32> to vector<8x512xf32>
    %105 = arith.mulf %100, %104 : vector<8x512xf32>
    %c496_i32_16 = arith.constant 496 : i32
    %106 = tpu.dynamic_rotate %63 by %c496_i32_16 dim 1 : vector<8x512xf32>, i32 -> vector<8x512xf32>
    %107 = vector.extract_strided_slice %1 {offsets = [7, 0], sizes = [1, 512], strides = [1, 1]} : vector<9x512xf32> to vector<1x512xf32>
    %108 = vector.shape_cast %107 : vector<1x512xf32> to vector<512xf32>
    %109 = vector.shape_cast %108 : vector<512xf32> to vector<1x512xf32>
    %110 = vector.broadcast %109 : vector<1x512xf32> to vector<8x512xf32>
    %111 = arith.mulf %106, %110 : vector<8x512xf32>
    %c495_i32_17 = arith.constant 495 : i32
    %112 = tpu.dynamic_rotate %63 by %c495_i32_17 dim 1 : vector<8x512xf32>, i32 -> vector<8x512xf32>
    %113 = vector.extract_strided_slice %1 {offsets = [8, 0], sizes = [1, 512], strides = [1, 1]} : vector<9x512xf32> to vector<1x512xf32>
    %114 = vector.shape_cast %113 : vector<1x512xf32> to vector<512xf32>
    %115 = vector.shape_cast %114 : vector<512xf32> to vector<1x512xf32>
    %116 = vector.broadcast %115 : vector<1x512xf32> to vector<8x512xf32>
    %117 = arith.mulf %112, %116 : vector<8x512xf32>
    %118 = tpu.concatenate %70, %76, %82, %88, %93, %99, %105, %111, %117 in 0 : vector<8x512xf32>, vector<8x512xf32>, vector<8x512xf32>, vector<8x512xf32>, vector<8x512xf32>, vector<8x512xf32>, vector<8x512xf32>, vector<8x512xf32>, vector<8x512xf32> -> vector<72x512xf32>
    %119 = arith.truncf %118 : vector<72x512xf32> to vector<72x512xbf16>
    %cst_18 = arith.constant dense<0.000000e+00> : vector<8x512xf32>
    %120 = tpu.matmul %64, %119, %cst_18 {dimension_numbers = #tpu.dot_dimension_numbers<[1], [0], [0], [1], [0, 0, 1, 1], [], []>} : vector<8x72xbf16>, vector<72x512xbf16>, vector<8x512xf32> -> vector<8x512xf32>
    %c0_19 = arith.constant 0 : index
    %c0_20 = arith.constant 0 : index
    %121 = vector.load %arg6[%c0_19, %c0_20] : memref<8x1xf32, #tpu.memory_space<vmem>>, vector<8x1xf32>
    %122 = vector.broadcast %121 : vector<8x1xf32> to vector<8x512xf32>
    %123 = arith.addf %120, %122 : vector<8x512xf32>
    %124 = arith.addf %123, %0 : vector<8x512xf32>
    %c0_21 = arith.constant 0 : index
    %c0_22 = arith.constant 0 : index
    %125 = vector.load %arg7[%c0_21, %c0_22] : memref<8x512xf32, #tpu.memory_space<vmem>>, vector<8x512xf32>
    tpu.vector_store %arg7[%c0_21, %c0_22], %124 {strides = array<i32>} : memref<8x512xf32, #tpu.memory_space<vmem>>, vector<8x512xf32>,
    return
  }
  func.func @transform_0(%arg0: i32) -> (i32, i32) {
    %c0_i32 = arith.constant 0 : i32
    %c0_i32_0 = arith.constant 0 : i32
    return %c0_i32, %arg0 : i32, i32
  }
  func.func @transform_1(%arg0: i32) -> (i32, i32) {
    %c0_i32 = arith.constant 0 : i32
    %c0_i32_0 = arith.constant 0 : i32
    %c0_i32_1 = arith.constant 0 : i32
    return %c0_i32, %c0_i32_0 : i32, i32
  }
  func.func @transform_2(%arg0: i32) -> (i32, i32) {
    %c0_i32 = arith.constant 0 : i32
    %c0_i32_0 = arith.constant 0 : i32
    %c0_i32_1 = arith.constant 0 : i32
    return %c0_i32, %c0_i32_0 : i32, i32
  }
  func.func @transform_3(%arg0: i32) -> (i32, i32) {
    %c0_i32 = arith.constant 0 : i32
    %c0_i32_0 = arith.constant 0 : i32
    %c0_i32_1 = arith.constant 0 : i32
    return %c0_i32, %c0_i32_0 : i32, i32
  }
  func.func @transform_4(%arg0: i32) -> (i32, i32) {
    %c0_i32 = arith.constant 0 : i32
    %c0_i32_0 = arith.constant 0 : i32
    %c0_i32_1 = arith.constant 0 : i32
    return %c0_i32, %c0_i32_0 : i32, i32
  }
  func.func @transform_5(%arg0: i32) -> (i32, i32) {
    %c0_i32 = arith.constant 0 : i32
    %c0_i32_0 = arith.constant 0 : i32
    %c0_i32_1 = arith.constant 0 : i32
    return %c0_i32, %c0_i32_0 : i32, i32
  }
  func.func @transform_6(%arg0: i32) -> (i32, i32) {
    %c0_i32 = arith.constant 0 : i32
    %c0_i32_0 = arith.constant 0 : i32
    return %c0_i32, %arg0 : i32, i32
  }
}

</mosaic_0001>

<llo_original>
// kernel: tpu_custom_call.1
$region0: #{tpu_custom_call.1}
  #allocation0 [shape = 'u32[]', space=smem, size = 0x4, offset = 0x4, fixed_abs, tag = 'smem constant byte address 0x4 - core index']
  #allocation1 [shape = 'u32[144,128]{1,0:T(1,128)}', space=vmem, size = 0x12000, scoped, tag = 'internal scratch']
  %s0 = inlined_call_operand.hbm [shape: f32[8,512], index: 0, kind: input, shape index: {}]
  %s1 = inlined_call_operand.hbm [shape: f32[9,512], index: 1, kind: input, shape index: {}]
  %s2 = inlined_call_operand.vmem [shape: bf16[8,72], index: 2, kind: input, shape index: {}]
  %s3 = inlined_call_operand.vmem [shape: f32[8,1], index: 3, kind: input, shape index: {}]
  %s4 = inlined_call_operand.vmem [shape: bf16[8,72], index: 4, kind: input, shape index: {}]
  %s5 = inlined_call_operand.vmem [shape: f32[8,1], index: 5, kind: input, shape index: {}]
  %s6 = inlined_call_operand.hbm [shape: f32[8,512], index: 6, kind: output, shape index: {}]
  %s7 = sld [smem:[#allocation0]]
  $region42: #{tpu_custom_call.1} parent=0
    _
  %s9 = ssub.s32 1, %s7
  %s10 = scalar_select 0, %s9, %s7
  $region1: #{tpu_custom_call.1} parent=0
    #allocation2 [shape = 'u8[16384]{0}', space=vmem, size = 0x4000, scoped, tag = 'input window, operand 0, single buffered']
    #allocation3 [shape = 's32[1]{0}', space=sflag, size = 0x4, scoped, tag = 'scoped memory for tpu_custom_call.1']
    #allocation4 [shape = 's32[1]{0}', space=sflag, size = 0x4, scoped, tag = 'scoped memory for tpu_custom_call.1']
    #allocation5 [shape = 'u8[32768]{0}', space=vmem, size = 0x8000, scoped, tag = 'input window, operand 1, single buffered']
    #allocation6 [shape = 's32[1]{0}', space=sflag, size = 0x4, scoped, tag = 'scoped memory for tpu_custom_call.1']
    #allocation7 [shape = 'u8[16384]{0}', space=vmem, size = 0x4000, scoped, tag = 'output window, operand 0, single buffered']
    %11 = vsyncpa [#allocation3], 0
    %12 = vsyncpa [#allocation6], 0
    %13 = vsyncpa [#allocation4], 0
    // Predicated region
    $region2: #{tpu_custom_call.1} parent=1 // pred_check
      _
    $region3: #{tpu_custom_call.1} parent=1 // pred_check_branch
      %15 = sbr.rel (0) target = $region5
    $region4: #{tpu_custom_call.1} parent=1 // pred_region
      %s17 = ssub.s32 512, 512
      %18 = vsyncadd [#allocation3], %s17
      %s20 = sshll.u32 [#allocation2], 4
      %s21 = int_to_ptr.vmem [resolvable:$true] %s20
      %23 = dma.hbm_to_vmem [thread:$0]  %s0, 512, %s21, [#allocation3]
    $region5: #{tpu_custom_call.1} parent=1 // pred_fallthru
      _
    // Predicated region
    $region6: #{tpu_custom_call.1} parent=1 // pred_check
      _
    $region7: #{tpu_custom_call.1} parent=1 // pred_check_branch
      %25 = sbr.rel (0) target = $region9
    $region8: #{tpu_custom_call.1} parent=1 // pred_region
      %s27 = ssub.s32 1024, 1024
      %28 = vsyncadd [#allocation6], %s27
      %s29 = sshll.u32 [#allocation5], 4
      %s30 = int_to_ptr.vmem [resolvable:$true] %s29
      %35 = dma.hbm_to_vmem [thread:$0]  %s1, 1024, %s30, [#allocation6], 512, 512, 32
    $region9: #{tpu_custom_call.1} parent=1 // pred_fallthru
      _
    // Predicated region
    $region10: #{tpu_custom_call.1} parent=1 // pred_check
      _
    $region11: #{tpu_custom_call.1} parent=1 // pred_check_branch
      %37 = sbr.rel (0) target = $region13
    $region12: #{tpu_custom_call.1} parent=1 // pred_region
      _
    $region13: #{tpu_custom_call.1} parent=1 // pred_fallthru
      _
    // Predicated region
    $region14: #{tpu_custom_call.1} parent=1 // pred_check
      _
    $region15: #{tpu_custom_call.1} parent=1 // pred_check_branch
      %39 = sbr.rel (0) target = $region17
    $region16: #{tpu_custom_call.1} parent=1 // pred_region
      _
    $region17: #{tpu_custom_call.1} parent=1 // pred_fallthru
      _
    // Predicated region
    $region18: #{tpu_custom_call.1} parent=1 // pred_check
      _
    $region19: #{tpu_custom_call.1} parent=1 // pred_check_branch
      %41 = sbr.rel (0) target = $region21
    $region20: #{tpu_custom_call.1} parent=1 // pred_region
      _
    $region21: #{tpu_custom_call.1} parent=1 // pred_fallthru
      _
    // Predicated region
    $region22: #{tpu_custom_call.1} parent=1 // pred_check
      _
    $region23: #{tpu_custom_call.1} parent=1 // pred_check_branch
      %43 = sbr.rel (0) target = $region25
    $region24: #{tpu_custom_call.1} parent=1 // pred_region
      _
    $region25: #{tpu_custom_call.1} parent=1 // pred_fallthru
      _
    // Predicated region
    $region26: #{tpu_custom_call.1} parent=1 // pred_check
      _
    $region27: #{tpu_custom_call.1} parent=1 // pred_check_branch
      %45 = sbr.rel (0) target = $region29
    $region28: #{tpu_custom_call.1} parent=1 // pred_region
      %46 = dma.done [#allocation3], 512
    $region29: #{tpu_custom_call.1} parent=1 // pred_fallthru
      _
    // Predicated region
    $region30: #{tpu_custom_call.1} parent=1 // pred_check
      _
    $region31: #{tpu_custom_call.1} parent=1 // pred_check_branch
      %48 = sbr.rel (0) target = $region33
    $region32: #{tpu_custom_call.1} parent=1 // pred_region
      %49 = dma.done [#allocation6], 1024
    $region33: #{tpu_custom_call.1} parent=1 // pred_fallthru
      _
    %v51 = vld [vmem:[#allocation2] sm:$0xff]
    %v52 = vld [vmem:[#allocation2 + $0x8] sm:$0xff]
    %v53 = vld [vmem:[#allocation2 + $0x10] sm:$0xff]
    %v54 = vld [vmem:[#allocation2 + $0x18] sm:$0xff]
    %v55 = vld [vmem:[#allocation5] sm:$0xff]
    %v56 = vld [vmem:[#allocation5 + $0x8] sm:$0xff]
    %v57 = vld [vmem:[#allocation5 + $0x10] sm:$0xff]
    %v58 = vld [vmem:[#allocation5 + $0x18] sm:$0xff]
    %v59 = vld [vmem:[#allocation5 + $0x20] sm:$0x1]
    %v60 = vld [vmem:[#allocation5 + $0x28] sm:$0x1]
    %v61 = vld [vmem:[#allocation5 + $0x30] sm:$0x1]
    %v62 = vld [vmem:[#allocation5 + $0x38] sm:$0x1]
    %v63 = vld [vmem:[%s2] sm:$0xf]
    %64 = vrot.lane.b32.xlu0 %v51, 17
    %v65 = vpop.permute.xlu0 %64
    %66 = vrot.lane.b32.xlu0 %v52, 17
    %v67 = vpop.permute.xlu0 %66
    %68 = vrot.lane.b32.xlu0 %v53, 17
    %v69 = vpop.permute.xlu0 %68
    %70 = vrot.lane.b32.xlu0 %v54, 17
    %v71 = vpop.permute.xlu0 %70
    %v72 = vlaneseq
    %v73 = vand.u32 %v72, 127
    %vm74 = vcmp.lt.s32.totalorder %v73, 17
    %v75 = vsel %vm74, %v69, %v71
    %v76 = vsel %vm74, %v67, %v69
    %v77 = vsel %vm74, %v65, %v67
    %v78 = vsel %vm74, %v71, %v65
    %v79 = vlaneseq
    %v80 = vshrl.u32 %v79, 7
    %v81 = vsub.s32 0, %v80
    %v82 = vrot.slane %v55, %v81
    %v83 = vlaneseq
    %v84 = vshrl.u32 %v83, 7
    %v85 = vsub.s32 0, %v84
    %v86 = vrot.slane %v56, %v85
    %v87 = vlaneseq
    %v88 = vshrl.u32 %v87, 7
    %v89 = vsub.s32 0, %v88
    %v90 = vrot.slane %v57, %v89
    %v91 = vlaneseq
    %v92 = vshrl.u32 %v91, 7
    %v93 = vsub.s32 0, %v92
    %v94 = vrot.slane %v58, %v93
    %v95 = vmul.f32 %v78, %v82
    %v96 = vmul.f32 %v77, %v86
    %v97 = vmul.f32 %v76, %v90
    %v98 = vmul.f32 %v75, %v94
    %99 = vrot.lane.b32.xlu0 %v51, 16
    %v100 = vpop.permute.xlu0 %99
    %101 = vrot.lane.b32.xlu0 %v52, 16
    %v102 = vpop.permute.xlu0 %101
    %103 = vrot.lane.b32.xlu0 %v53, 16
    %v104 = vpop.permute.xlu0 %103
    %105 = vrot.lane.b32.xlu0 %v54, 16
    %v106 = vpop.permute.xlu0 %105
    %vm107 = vcmp.lt.s32.totalorder %v73, 16
    %v108 = vsel %vm107, %v104, %v106
    %v109 = vsel %vm107, %v102, %v104
    %v110 = vsel %vm107, %v100, %v102
    %v111 = vsel %vm107, %v106, %v100
    %v112 = vlaneseq
    %v113 = vshrl.u32 %v112, 7
    %v114 = vsub.s32 1, %v113
    %v115 = vrot.slane %v55, %v114
    %v116 = vlaneseq
    %v117 = vshrl.u32 %v116, 7
    %v118 = vsub.s32 1, %v117
    %v119 = vrot.slane %v56, %v118
    %v120 = vlaneseq
    %v121 = vshrl.u32 %v120, 7
    %v122 = vsub.s32 1, %v121
    %v123 = vrot.slane %v57, %v122
    %v124 = vlaneseq
    %v125 = vshrl.u32 %v124, 7
    %v126 = vsub.s32 1, %v125
    %v127 = vrot.slane %v58, %v126
    %v128 = vmul.f32 %v111, %v115
    %v129 = vmul.f32 %v110, %v119
    %v130 = vmul.f32 %v109, %v123
    %v131 = vmul.f32 %v108, %v127
    %132 = vrot.lane.b32.xlu0 %v51, 15
    %v133 = vpop.permute.xlu0 %132
    %134 = vrot.lane.b32.xlu0 %v52, 15
    %v135 = vpop.permute.xlu0 %134
    %136 = vrot.lane.b32.xlu0 %v53, 15
    %v137 = vpop.permute.xlu0 %136
    %138 = vrot.lane.b32.xlu0 %v54, 15
    %v139 = vpop.permute.xlu0 %138
    %vm140 = vcmp.lt.s32.totalorder %v73, 15
    %v141 = vsel %vm140, %v137, %v139
    %v142 = vsel %vm140, %v135, %v137
    %v143 = vsel %vm140, %v133, %v135
    %v144 = vsel %vm140, %v139, %v133
    %v145 = vlaneseq
    %v146 = vshrl.u32 %v145, 7
    %v147 = vsub.s32 2, %v146
    %v148 = vrot.slane %v55, %v147
    %v149 = vlaneseq
    %v150 = vshrl.u32 %v149, 7
    %v151 = vsub.s32 2, %v150
    %v152 = vrot.slane %v56, %v151
    %v153 = vlaneseq
    %v154 = vshrl.u32 %v153, 7
    %v155 = vsub.s32 2, %v154
    %v156 = vrot.slane %v57, %v155
    %v157 = vlaneseq
    %v158 = vshrl.u32 %v157, 7
    %v159 = vsub.s32 2, %v158
    %v160 = vrot.slane %v58, %v159
    %v161 = vmul.f32 %v144, %v148
    %v162 = vmul.f32 %v143, %v152
    %v163 = vmul.f32 %v142, %v156
    %v164 = vmul.f32 %v141, %v160
    %165 = vrot.lane.b32.xlu0 %v51, 1
    %v166 = vpop.permute.xlu0 %165
    %167 = vrot.lane.b32.xlu0 %v52, 1
    %v168 = vpop.permute.xlu0 %167
    %169 = vrot.lane.b32.xlu0 %v53, 1
    %v170 = vpop.permute.xlu0 %169
    %171 = vrot.lane.b32.xlu0 %v54, 1
    %v172 = vpop.permute.xlu0 %171
    %vm173 = vcmp.lt.s32.totalorder %v73, 1
    %v174 = vsel %vm173, %v170, %v172
    %v175 = vsel %vm173, %v168, %v170
    %v176 = vsel %vm173, %v166, %v168
    %v177 = vsel %vm173, %v172, %v166
    %v178 = vlaneseq
    %v179 = vshrl.u32 %v178, 7
    %v180 = vsub.s32 3, %v179
    %v181 = vrot.slane %v55, %v180
    %v182 = vlaneseq
    %v183 = vshrl.u32 %v182, 7
    %v184 = vsub.s32 3, %v183
    %v185 = vrot.slane %v56, %v184
    %v186 = vlaneseq
    %v187 = vshrl.u32 %v186, 7
    %v188 = vsub.s32 3, %v187
    %v189 = vrot.slane %v57, %v188
    %v190 = vlaneseq
    %v191 = vshrl.u32 %v190, 7
    %v192 = vsub.s32 3, %v191
    %v193 = vrot.slane %v58, %v192
    %v194 = vmul.f32 %v177, %v181
    %v195 = vmul.f32 %v176, %v185
    %v196 = vmul.f32 %v175, %v189
    %v197 = vmul.f32 %v174, %v193
    %v198 = vlaneseq
    %v199 = vshrl.u32 %v198, 7
    %v200 = vsub.s32 4, %v199
    %v201 = vrot.slane %v55, %v200
    %v202 = vlaneseq
    %v203 = vshrl.u32 %v202, 7
    %v204 = vsub.s32 4, %v203
    %v205 = vrot.slane %v56, %v204
    %v206 = vlaneseq
    %v207 = vshrl.u32 %v206, 7
    %v208 = vsub.s32 4, %v207
    %v209 = vrot.slane %v57, %v208
    %v210 = vlaneseq
    %v211 = vshrl.u32 %v210, 7
    %v212 = vsub.s32 4, %v211
    %v213 = vrot.slane %v58, %v212
    %v214 = vmul.f32 %v51, %v201
    %v215 = vmul.f32 %v52, %v205
    %v216 = vmul.f32 %v53, %v209
    %v217 = vmul.f32 %v54, %v213
    %218 = vrot.lane.b32.xlu0 %v51, 127
    %v219 = vpop.permute.xlu0 %218
    %220 = vrot.lane.b32.xlu0 %v52, 127
    %v221 = vpop.permute.xlu0 %220
    %222 = vrot.lane.b32.xlu0 %v53, 127
    %v223 = vpop.permute.xlu0 %222
    %224 = vrot.lane.b32.xlu0 %v54, 127
    %v225 = vpop.permute.xlu0 %224
    %vm226 = vcmp.lt.s32.totalorder %v73, 127
    %v227 = vsel %vm226, %v223, %v225
    %v228 = vsel %vm226, %v221, %v223
    %v229 = vsel %vm226, %v219, %v221
    %v230 = vsel %vm226, %v225, %v219
    %v231 = vlaneseq
    %v232 = vshrl.u32 %v231, 7
    %v233 = vsub.s32 5, %v232
    %v234 = vrot.slane %v55, %v233
    %v235 = vlaneseq
    %v236 = vshrl.u32 %v235, 7
    %v237 = vsub.s32 5, %v236
    %v238 = vrot.slane %v56, %v237
    %v239 = vlaneseq
    %v240 = vshrl.u32 %v239, 7
    %v241 = vsub.s32 5, %v240
    %v242 = vrot.slane %v57, %v241
    %v243 = vlaneseq
    %v244 = vshrl.u32 %v243, 7
    %v245 = vsub.s32 5, %v244
    %v246 = vrot.slane %v58, %v245
    %v247 = vmul.f32 %v229, %v234
    %v248 = vmul.f32 %v228, %v238
    %v249 = vmul.f32 %v227, %v242
    %v250 = vmul.f32 %v230, %v246
    %251 = vrot.lane.b32.xlu0 %v51, 113
    %v252 = vpop.permute.xlu0 %251
    %253 = vrot.lane.b32.xlu0 %v52, 113
    %v254 = vpop.permute.xlu0 %253
    %255 = vrot.lane.b32.xlu0 %v53, 113
    %v256 = vpop.permute.xlu0 %255
    %257 = vrot.lane.b32.xlu0 %v54, 113
    %v258 = vpop.permute.xlu0 %257
    %vm259 = vcmp.lt.s32.totalorder %v73, 113
    %v260 = vsel %vm259, %v256, %v258
    %v261 = vsel %vm259, %v254, %v256
    %v262 = vsel %vm259, %v252, %v254
    %v263 = vsel %vm259, %v258, %v252
    %v264 = vlaneseq
    %v265 = vshrl.u32 %v264, 7
    %v266 = vsub.s32 6, %v265
    %v267 = vrot.slane %v55, %v266
    %v268 = vlaneseq
    %v269 = vshrl.u32 %v268, 7
    %v270 = vsub.s32 6, %v269
    %v271 = vrot.slane %v56, %v270
    %v272 = vlaneseq
    %v273 = vshrl.u32 %v272, 7
    %v274 = vsub.s32 6, %v273
    %v275 = vrot.slane %v57, %v274
    %v276 = vlaneseq
    %v277 = vshrl.u32 %v276, 7
    %v278 = vsub.s32 6, %v277
    %v279 = vrot.slane %v58, %v278
    %v280 = vmul.f32 %v262, %v267
    %v281 = vmul.f32 %v261, %v271
    %v282 = vmul.f32 %v260, %v275
    %v283 = vmul.f32 %v263, %v279
    %284 = vrot.lane.b32.xlu0 %v51, 112
    %v285 = vpop.permute.xlu0 %284
    %286 = vrot.lane.b32.xlu0 %v52, 112
    %v287 = vpop.permute.xlu0 %286
    %288 = vrot.lane.b32.xlu0 %v53, 112
    %v289 = vpop.permute.xlu0 %288
    %290 = vrot.lane.b32.xlu0 %v54, 112
    %v291 = vpop.permute.xlu0 %290
    %vm292 = vcmp.lt.s32.totalorder %v73, 112
    %v293 = vsel %vm292, %v289, %v291
    %v294 = vsel %vm292, %v287, %v289
    %v295 = vsel %vm292, %v285, %v287
    %v296 = vsel %vm292, %v291, %v285
    %v297 = vlaneseq
    %v298 = vshrl.u32 %v297, 7
    %v299 = vsub.s32 7, %v298
    %v300 = vrot.slane %v55, %v299
    %v301 = vlaneseq
    %v302 = vshrl.u32 %v301, 7
    %v303 = vsub.s32 7, %v302
    %v304 = vrot.slane %v56, %v303
    %v305 = vlaneseq
    %v306 = vshrl.u32 %v305, 7
    %v307 = vsub.s32 7, %v306
    %v308 = vrot.slane %v57, %v307
    %v309 = vlaneseq
    %v310 = vshrl.u32 %v309, 7
    %v311 = vsub.s32 7, %v310
    %v312 = vrot.slane %v58, %v311
    %v313 = vmul.f32 %v295, %v300
    %v314 = vmul.f32 %v294, %v304
    %v315 = vmul.f32 %v293, %v308
    %v316 = vmul.f32 %v296, %v312
    %317 = vrot.lane.b32.xlu0 %v51, 111
    %v318 = vpop.permute.xlu0 %317
    %319 = vrot.lane.b32.xlu0 %v52, 111
    %v320 = vpop.permute.xlu0 %319
    %321 = vrot.lane.b32.xlu0 %v53, 111
    %v322 = vpop.permute.xlu0 %321
    %323 = vrot.lane.b32.xlu0 %v54, 111
    %v324 = vpop.permute.xlu0 %323
    %vm325 = vcmp.lt.s32.totalorder %v73, 111
    %v326 = vsel %vm325, %v322, %v324
    %v327 = vsel %vm325, %v320, %v322
    %v328 = vsel %vm325, %v318, %v320
    %v329 = vsel %vm325, %v324, %v318
    %v330 = vlaneseq
    %v331 = vshrl.u32 %v330, 7
    %v332 = vsub.s32 0, %v331
    %v333 = vrot.slane %v59, %v332
    %v334 = vlaneseq
    %v335 = vshrl.u32 %v334, 7
    %v336 = vsub.s32 0, %v335
    %v337 = vrot.slane %v60, %v336
    %v338 = vlaneseq
    %v339 = vshrl.u32 %v338, 7
    %v340 = vsub.s32 0, %v339
    %v341 = vrot.slane %v61, %v340
    %v342 = vlaneseq
    %v343 = vshrl.u32 %v342, 7
    %v344 = vsub.s32 0, %v343
    %v345 = vrot.slane %v62, %v344
    %v346 = vmul.f32 %v328, %v333
    %v347 = vmul.f32 %v327, %v337
    %v348 = vmul.f32 %v326, %v341
    %v349 = vmul.f32 %v329, %v345
    %v350 = vpack.c.bf16 %v128, %v95
    %v351 = vpack.c.bf16 %v129, %v96
    %v352 = vpack.c.bf16 %v130, %v97
    %v353 = vpack.c.bf16 %v131, %v98
    %v354 = vpack.c.bf16 %v194, %v161
    %v355 = vpack.c.bf16 %v195, %v162
    %v356 = vpack.c.bf16 %v196, %v163
    %v357 = vpack.c.bf16 %v197, %v164
    %v358 = vpack.c.bf16 %v247, %v214
    %v359 = vpack.c.bf16 %v248, %v215
    %v360 = vpack.c.bf16 %v249, %v216
    %v361 = vpack.c.bf16 %v250, %v217
    %v362 = vpack.c.bf16 %v313, %v280
    %v363 = vpack.c.bf16 %v314, %v281
    %v364 = vpack.c.bf16 %v315, %v282
    %v365 = vpack.c.bf16 %v316, %v283
    %v366 = vpack.c.bf16 %v346, %v346
    %v367 = vpack.c.bf16 %v347, %v347
    %v368 = vpack.c.bf16 %v348, %v348
    %v369 = vpack.c.bf16 %v349, %v349
    %v370 = vld [vmem:[%s3] sm:$0xff]
    %372 = vset.pattern.permute.xlu0 0
    %373 = vperm.xlu0 %372, %v370
    %v374 = vpop.permute.xlu0 %373
    %vm376 = vcmask 588800
    %v378 = vsel %vm376, %v63, 0
    %vm380 = vcmask 1043456
    %v382 = vsel %vm380, %v366, 0
    %v385 = vsel %vm380, %v367, 0
    %v388 = vsel %vm380, %v368, 0
    %v391 = vsel %vm380, %v369, 0
    %393 = vmatprep.subr.bf16.mxu0 %v351
    %394 = vmatpush1.bf16.msra.mxu0 %v350
    %395 = vmatprep.subr.bf16.mxu0 %v355
    %396 = vmatpush1.bf16.msra.mxu0 %v354
    %397 = vmatprep.subr.bf16.mxu0 %v359
    %398 = vmatpush1.bf16.msra.mxu0 %v358
    %399 = vmatprep.subr.bf16.mxu0 %v363
    %400 = vmatpush1.bf16.msra.mxu0 %v362
    %401 = vmatprep.subr.bf16.mxu0 %v385
    %402 = vmatpush1.bf16.msra.mxu0 %v382
    %403 = vmatprep.subr.bf16.mxu0 0
    %404 = vmatpush1.bf16.msra.mxu0 0
    %405 = vmatprep.subr.bf16.mxu0 0
    %406 = vmatpush1.bf16.msra.mxu0 0
    %407 = vmatprep.subr.bf16.mxu0 0
    %408 = vmatpush1.bf16.msra.mxu0 0
    %409 = vmatprep.subr.bf16.mxu0 0
    %410 = vmatpush1.bf16.msra.mxu0 0
    %411 = vmatprep.subr.bf16.mxu0 0
    %412 = vmatpush1.bf16.msra.mxu0 0
    %413 = vmatprep.subr.bf16.mxu0 0
    %414 = vmatpush1.bf16.msra.mxu0 0
    %415 = vmatprep.subr.bf16.mxu0 0
    %416 = vmatpush1.bf16.msra.mxu0 0
    %417 = vmatprep.subr.bf16.mxu0 0
    %418 = vmatpush1.bf16.msra.mxu0 0
    %419 = vmatprep.subr.bf16.mxu0 0
    %420 = vmatpush1.bf16.msra.mxu0 0
    %421 = vmatprep.subr.bf16.mxu0 0
    %422 = vmatpush1.bf16.msra.mxu0 0
    %423 = vmatprep.subr.bf16.mxu0 0
    %424 = vmatpush1.bf16.msra.mxu0 0
    %425 = vmatprep.mubr.bf16.mxu0 0
    %426 = vmatmul.mubr.bf16.gmra.mrb[0].mxu0 %v378
    %v427 = vpop.f32.mrb[0].mxu0
    %v428 = vadd.f32 %v374, %v427
    %v429 = vpop.f32.mrb[0].mxu0
    %v430 = vadd.f32 %v374, %v429
    %v431 = vpop.f32.mrb[0].mxu0
    %v432 = vpop.f32.mrb[0].mxu0
    %433 = vdwg.mxu0
    %434 = vmatprep.subr.bf16.mxu0 %v353
    %435 = vmatpush1.bf16.msra.mxu0 %v352
    %436 = vmatprep.subr.bf16.mxu0 %v357
    %437 = vmatpush1.bf16.msra.mxu0 %v356
    %438 = vmatprep.subr.bf16.mxu0 %v361
    %439 = vmatpush1.bf16.msra.mxu0 %v360
    %440 = vmatprep.subr.bf16.mxu0 %v365
    %441 = vmatpush1.bf16.msra.mxu0 %v364
    %442 = vmatprep.subr.bf16.mxu0 %v391
    %443 = vmatpush1.bf16.msra.mxu0 %v388
    %444 = vmatprep.subr.bf16.mxu0 0
    %445 = vmatpush1.bf16.msra.mxu0 0
    %446 = vmatprep.subr.bf16.mxu0 0
    %447 = vmatpush1.bf16.msra.mxu0 0
    %448 = vmatprep.subr.bf16.mxu0 0
    %449 = vmatpush1.bf16.msra.mxu0 0
    %450 = vmatprep.subr.bf16.mxu0 0
    %451 = vmatpush1.bf16.msra.mxu0 0
    %452 = vmatprep.subr.bf16.mxu0 0
    %453 = vmatpush1.bf16.msra.mxu0 0
    %454 = vmatprep.subr.bf16.mxu0 0
    %455 = vmatpush1.bf16.msra.mxu0 0
    %456 = vmatprep.subr.bf16.mxu0 0
    %457 = vmatpush1.bf16.msra.mxu0 0
    %458 = vmatprep.subr.bf16.mxu0 0
    %459 = vmatpush1.bf16.msra.mxu0 0
    %460 = vmatprep.subr.bf16.mxu0 0
    %461 = vmatpush1.bf16.msra.mxu0 0
    %462 = vmatprep.subr.bf16.mxu0 0
    %463 = vmatpush1.bf16.msra.mxu0 0
    %464 = vmatprep.subr.bf16.mxu0 0
    %465 = vmatpush1.bf16.msra.mxu0 0
    %466 = vmatprep.mubr.bf16.mxu0 0
    %467 = vmatmul.mubr.bf16.gmra.mrb[0].mxu0 %v378
    %v468 = vpop.f32.mrb[0].mxu0
    %v469 = vadd.f32 %v374, %v468
    %v470 = vpop.f32.mrb[0].mxu0
    %v471 = vadd.f32 %v374, %v470
    %v472 = vpop.f32.mrb[0].mxu0
    %v473 = vpop.f32.mrb[0].mxu0
    %474 = vdwg.mxu0
    %v475 = vmax.f32 %v428, 0.0
    %v476 = vmax.f32 %v430, 0.0
    %v477 = vmax.f32 %v469, 0.0
    %v478 = vmax.f32 %v471, 0.0
    %v479 = vld [vmem:[%s4] sm:$0xf]
    %480 = vrot.lane.b32.xlu0 %v475, 17
    %v481 = vpop.permute.xlu0 %480
    %482 = vrot.lane.b32.xlu0 %v476, 17
    %v483 = vpop.permute.xlu0 %482
    %484 = vrot.lane.b32.xlu0 %v477, 17
    %v485 = vpop.permute.xlu0 %484
    %486 = vrot.lane.b32.xlu0 %v478, 17
    %v487 = vpop.permute.xlu0 %486
    %v488 = vsel %vm74, %v485, %v487
    %v489 = vsel %vm74, %v483, %v485
    %v490 = vsel %vm74, %v481, %v483
    %v491 = vsel %vm74, %v487, %v481
    %v492 = vmul.f32 %v491, %v82
    %v493 = vmul.f32 %v490, %v86
    %v494 = vmul.f32 %v489, %v90
    %v495 = vmul.f32 %v488, %v94
    %496 = vrot.lane.b32.xlu0 %v475, 16
    %v497 = vpop.permute.xlu0 %496
    %498 = vrot.lane.b32.xlu0 %v476, 16
    %v499 = vpop.permute.xlu0 %498
    %500 = vrot.lane.b32.xlu0 %v477, 16
    %v501 = vpop.permute.xlu0 %500
    %502 = vrot.lane.b32.xlu0 %v478, 16
    %v503 = vpop.permute.xlu0 %502
    %v504 = vsel %vm107, %v501, %v503
    %v505 = vsel %vm107, %v499, %v501
    %v506 = vsel %vm107, %v497, %v499
    %v507 = vsel %vm107, %v503, %v497
    %v508 = vmul.f32 %v507, %v115
    %v509 = vmul.f32 %v506, %v119
    %v510 = vmul.f32 %v505, %v123
    %v511 = vmul.f32 %v504, %v127
    %512 = vrot.lane.b32.xlu0 %v475, 15
    %v513 = vpop.permute.xlu0 %512
    %514 = vrot.lane.b32.xlu0 %v476, 15
    %v515 = vpop.permute.xlu0 %514
    %516 = vrot.lane.b32.xlu0 %v477, 15
    %v517 = vpop.permute.xlu0 %516
    %518 = vrot.lane.b32.xlu0 %v478, 15
    %v519 = vpop.permute.xlu0 %518
    %v520 = vsel %vm140, %v517, %v519
    %v521 = vsel %vm140, %v515, %v517
    %v522 = vsel %vm140, %v513, %v515
    %v523 = vsel %vm140, %v519, %v513
    %v524 = vmul.f32 %v523, %v148
    %v525 = vmul.f32 %v522, %v152
    %v526 = vmul.f32 %v521, %v156
    %v527 = vmul.f32 %v520, %v160
    %528 = vrot.lane.b32.xlu0 %v475, 1
    %v529 = vpop.permute.xlu0 %528
    %530 = vrot.lane.b32.xlu0 %v476, 1
    %v531 = vpop.permute.xlu0 %530
    %532 = vrot.lane.b32.xlu0 %v477, 1
    %v533 = vpop.permute.xlu0 %532
    %534 = vrot.lane.b32.xlu0 %v478, 1
    %v535 = vpop.permute.xlu0 %534
    %v536 = vsel %vm173, %v533, %v535
    %v537 = vsel %vm173, %v531, %v533
    %v538 = vsel %vm173, %v529, %v531
    %v539 = vsel %vm173, %v535, %v529
    %v540 = vmul.f32 %v539, %v181
    %v541 = vmul.f32 %v538, %v185
    %v542 = vmul.f32 %v537, %v189
    %v543 = vmul.f32 %v536, %v193
    %v544 = vmul.f32 %v475, %v201
    %v545 = vmul.f32 %v476, %v205
    %v546 = vmul.f32 %v477, %v209
    %v547 = vmul.f32 %v478, %v213
    %548 = vrot.lane.b32.xlu0 %v475, 127
    %v549 = vpop.permute.xlu0 %548
    %550 = vrot.lane.b32.xlu0 %v476, 127
    %v551 = vpop.permute.xlu0 %550
    %552 = vrot.lane.b32.xlu0 %v477, 127
    %v553 = vpop.permute.xlu0 %552
    %554 = vrot.lane.b32.xlu0 %v478, 127
    %v555 = vpop.permute.xlu0 %554
    %v556 = vsel %vm226, %v553, %v555
    %v557 = vsel %vm226, %v551, %v553
    %v558 = vsel %vm226, %v549, %v551
    %v559 = vsel %vm226, %v555, %v549
    %v560 = vmul.f32 %v558, %v234
    %v561 = vmul.f32 %v557, %v238
    %v562 = vmul.f32 %v556, %v242
    %v563 = vmul.f32 %v559, %v246
    %564 = vrot.lane.b32.xlu0 %v475, 113
    %v565 = vpop.permute.xlu0 %564
    %566 = vrot.lane.b32.xlu0 %v476, 113
    %v567 = vpop.permute.xlu0 %566
    %568 = vrot.lane.b32.xlu0 %v477, 113
    %v569 = vpop.permute.xlu0 %568
    %570 = vrot.lane.b32.xlu0 %v478, 113
    %v571 = vpop.permute.xlu0 %570
    %v572 = vsel %vm259, %v569, %v571
    %v573 = vsel %vm259, %v567, %v569
    %v574 = vsel %vm259, %v565, %v567
    %v575 = vsel %vm259, %v571, %v565
    %v576 = vmul.f32 %v574, %v267
    %v577 = vmul.f32 %v573, %v271
    %v578 = vmul.f32 %v572, %v275
    %v579 = vmul.f32 %v575, %v279
    %580 = vrot.lane.b32.xlu0 %v475, 112
    %v581 = vpop.permute.xlu0 %580
    %582 = vrot.lane.b32.xlu0 %v476, 112
    %v583 = vpop.permute.xlu0 %582
    %584 = vrot.lane.b32.xlu0 %v477, 112
    %v585 = vpop.permute.xlu0 %584
    %586 = vrot.lane.b32.xlu0 %v478, 112
    %v587 = vpop.permute.xlu0 %586
    %v588 = vsel %vm292, %v585, %v587
    %v589 = vsel %vm292, %v583, %v585
    %v590 = vsel %vm292, %v581, %v583
    %v591 = vsel %vm292, %v587, %v581
    %v592 = vmul.f32 %v590, %v300
    %v593 = vmul.f32 %v589, %v304
    %v594 = vmul.f32 %v588, %v308
    %v595 = vmul.f32 %v591, %v312
    %596 = vrot.lane.b32.xlu0 %v475, 111
    %v597 = vpop.permute.xlu0 %596
    %598 = vrot.lane.b32.xlu0 %v476, 111
    %v599 = vpop.permute.xlu0 %598
    %600 = vrot.lane.b32.xlu0 %v477, 111
    %v601 = vpop.permute.xlu0 %600
    %602 = vrot.lane.b32.xlu0 %v478, 111
    %v603 = vpop.permute.xlu0 %602
    %v604 = vsel %vm325, %v601, %v603
    %v605 = vsel %vm325, %v599, %v601
    %v606 = vsel %vm325, %v597, %v599
    %v607 = vsel %vm325, %v603, %v597
    %v608 = vmul.f32 %v606, %v333
    %v609 = vmul.f32 %v605, %v337
    %v610 = vmul.f32 %v604, %v341
    %v611 = vmul.f32 %v607, %v345
    %v612 = vpack.c.bf16 %v508, %v492
    %v613 = vpack.c.bf16 %v509, %v493
    %v614 = vpack.c.bf16 %v510, %v494
    %v615 = vpack.c.bf16 %v511, %v495
    %v616 = vpack.c.bf16 %v540, %v524
    %v617 = vpack.c.bf16 %v541, %v525
    %v618 = vpack.c.bf16 %v542, %v526
    %v619 = vpack.c.bf16 %v543, %v527
    %v620 = vpack.c.bf16 %v560, %v544
    %v621 = vpack.c.bf16 %v561, %v545
    %v622 = vpack.c.bf16 %v562, %v546
    %v623 = vpack.c.bf16 %v563, %v547
    %v624 = vpack.c.bf16 %v592, %v576
    %v625 = vpack.c.bf16 %v593, %v577
    %v626 = vpack.c.bf16 %v594, %v578
    %v627 = vpack.c.bf16 %v595, %v579
    %v628 = vpack.c.bf16 %v608, %v608
    %v629 = vpack.c.bf16 %v609, %v609
    %v630 = vpack.c.bf16 %v610, %v610
    %v631 = vpack.c.bf16 %v611, %v611
    %v632 = vld [vmem:[%s5] sm:$0xff]
    %634 = vset.pattern.permute.xlu0 0
    %635 = vperm.xlu0 %634, %v632
    %v636 = vpop.permute.xlu0 %635
    %v639 = vsel %vm376, %v479, 0
    %v642 = vsel %vm380, %v628, 0
    %v645 = vsel %vm380, %v629, 0
    %v648 = vsel %vm380, %v630, 0
    %v651 = vsel %vm380, %v631, 0
    %653 = vmatprep.subr.bf16.mxu0 %v613
    %654 = vmatpush1.bf16.msra.mxu0 %v612
    %655 = vmatprep.subr.bf16.mxu0 %v617
    %656 = vmatpush1.bf16.msra.mxu0 %v616
    %657 = vmatprep.subr.bf16.mxu0 %v621
    %658 = vmatpush1.bf16.msra.mxu0 %v620
    %659 = vmatprep.subr.bf16.mxu0 %v625
    %660 = vmatpush1.bf16.msra.mxu0 %v624
    %661 = vmatprep.subr.bf16.mxu0 %v645
    %662 = vmatpush1.bf16.msra.mxu0 %v642
    %663 = vmatprep.subr.bf16.mxu0 0
    %664 = vmatpush1.bf16.msra.mxu0 0
    %665 = vmatprep.subr.bf16.mxu0 0
    %666 = vmatpush1.bf16.msra.mxu0 0
    %667 = vmatprep.subr.bf16.mxu0 0
    %668 = vmatpush1.bf16.msra.mxu0 0
    %669 = vmatprep.subr.bf16.mxu0 0
    %670 = vmatpush1.bf16.msra.mxu0 0
    %671 = vmatprep.subr.bf16.mxu0 0
    %672 = vmatpush1.bf16.msra.mxu0 0
    %673 = vmatprep.subr.bf16.mxu0 0
    %674 = vmatpush1.bf16.msra.mxu0 0
    %675 = vmatprep.subr.bf16.mxu0 0
    %676 = vmatpush1.bf16.msra.mxu0 0
    %677 = vmatprep.subr.bf16.mxu0 0
    %678 = vmatpush1.bf16.msra.mxu0 0
    %679 = vmatprep.subr.bf16.mxu0 0
    %680 = vmatpush1.bf16.msra.mxu0 0
    %681 = vmatprep.subr.bf16.mxu0 0
    %682 = vmatpush1.bf16.msra.mxu0 0
    %683 = vmatprep.subr.bf16.mxu0 0
    %684 = vmatpush1.bf16.msra.mxu0 0
    %685 = vmatprep.mubr.bf16.mxu0 0
    %686 = vmatmul.mubr.bf16.gmra.mrb[0].mxu0 %v639
    %v687 = vpop.f32.mrb[0].mxu0
    %v688 = vadd.f32 %v636, %v687
    %v689 = vpop.f32.mrb[0].mxu0
    %v690 = vadd.f32 %v636, %v689
    %v691 = vpop.f32.mrb[0].mxu0
    %v692 = vpop.f32.mrb[0].mxu0
    %693 = vdwg.mxu0
    %694 = vmatprep.subr.bf16.mxu0 %v615
    %695 = vmatpush1.bf16.msra.mxu0 %v614
    %696 = vmatprep.subr.bf16.mxu0 %v619
    %697 = vmatpush1.bf16.msra.mxu0 %v618
    %698 = vmatprep.subr.bf16.mxu0 %v623
    %699 = vmatpush1.bf16.msra.mxu0 %v622
    %700 = vmatprep.subr.bf16.mxu0 %v627
    %701 = vmatpush1.bf16.msra.mxu0 %v626
    %702 = vmatprep.subr.bf16.mxu0 %v651
    %703 = vmatpush1.bf16.msra.mxu0 %v648
    %704 = vmatprep.subr.bf16.mxu0 0
    %705 = vmatpush1.bf16.msra.mxu0 0
    %706 = vmatprep.subr.bf16.mxu0 0
    %707 = vmatpush1.bf16.msra.mxu0 0
    %708 = vmatprep.subr.bf16.mxu0 0
    %709 = vmatpush1.bf16.msra.mxu0 0
    %710 = vmatprep.subr.bf16.mxu0 0
    %711 = vmatpush1.bf16.msra.mxu0 0
    %712 = vmatprep.subr.bf16.mxu0 0
    %713 = vmatpush1.bf16.msra.mxu0 0
    %714 = vmatprep.subr.bf16.mxu0 0
    %715 = vmatpush1.bf16.msra.mxu0 0
    %716 = vmatprep.subr.bf16.mxu0 0
    %717 = vmatpush1.bf16.msra.mxu0 0
    %718 = vmatprep.subr.bf16.mxu0 0
    %719 = vmatpush1.bf16.msra.mxu0 0
    %720 = vmatprep.subr.bf16.mxu0 0
    %721 = vmatpush1.bf16.msra.mxu0 0
    %722 = vmatprep.subr.bf16.mxu0 0
    %723 = vmatpush1.bf16.msra.mxu0 0
    %724 = vmatprep.subr.bf16.mxu0 0
    %725 = vmatpush1.bf16.msra.mxu0 0
    %726 = vmatprep.mubr.bf16.mxu0 0
    %727 = vmatmul.mubr.bf16.gmra.mrb[0].mxu0 %v639
    %v728 = vpop.f32.mrb[0].mxu0
    %v729 = vadd.f32 %v636, %v728
    %v730 = vpop.f32.mrb[0].mxu0
    %v731 = vadd.f32 %v636, %v730
    %v732 = vpop.f32.mrb[0].mxu0
    %v733 = vpop.f32.mrb[0].mxu0
    %734 = vdwg.mxu0
    %v735 = vadd.f32 %v688, %v51
    %v736 = vadd.f32 %v690, %v52
    %v737 = vadd.f32 %v729, %v53
    %v738 = vadd.f32 %v731, %v54
    %739 = vst [vmem:[#allocation7] sm:$0xff] %v735
    %740 = vst [vmem:[#allocation7 + $0x8] sm:$0xff] %v736
    %741 = vst [vmem:[#allocation7 + $0x10] sm:$0xff] %v737
    %742 = vst [vmem:[#allocation7 + $0x18] sm:$0xff] %v738
    // Predicated region
    $region34: #{tpu_custom_call.1} parent=1 // pred_check
      _
    $region35: #{tpu_custom_call.1} parent=1 // pred_check_branch
      %744 = sbr.rel (0) target = $region37
    $region36: #{tpu_custom_call.1} parent=1 // pred_region
      %s746 = ssub.s32 512, 512
      %747 = vsyncadd [#allocation4], %s746
      %s749 = sshll.u32 [#allocation7], 4
      %s750 = int_to_ptr.vmem [resolvable:$true] %s749
      %752 = dma.vmem_to_hbm [thread:$0]  %s750, 512, %s6, [#allocation4]
    $region37: #{tpu_custom_call.1} parent=1 // pred_fallthru
      _
    // Predicated region
    $region38: #{tpu_custom_call.1} parent=1 // pred_check
      _
    $region39: #{tpu_custom_call.1} parent=1 // pred_check_branch
      %754 = sbr.rel (0) target = $region41
    $region40: #{tpu_custom_call.1} parent=1 // pred_region
      %755 = dma.done [#allocation4], 512
    $region41: #{tpu_custom_call.1} parent=1 // pred_fallthru
      _
    %756 = vsyncpa [#allocation3], 1
    %757 = vsyncpa [#allocation6], 1
    %758 = vsyncpa [#allocation4], 1

</llo_original>
